<compile_context>
chip_gen: v7x
topology: tpu7x:2x2x1
jax: 0.10.0
libtpu: 0.0.40
codegen_flags: <defaults>
</compile_context>

<pallas_src>
import jax
import jax.numpy as jnp
from jax.experimental import pallas as pl
from jax.experimental.pallas import tpu as pltpu


def _round_up(x, m):
    return ((x + m - 1) // m) * m


# ---------------------------------------------------------------------------
# Fused kernel: y = ReLU( shift_L + W_L @ ... ReLU( shift_0 + W_0 @ x ) )
# ---------------------------------------------------------------------------
def _make_fused_kernel(num_layers):
    def kernel(x_ref, *refs):
        # x_ref:  (1, C_in, TILE) f32 activation tile
        # refs:   w_0, shift_0, ..., w_{L-1}, shift_{L-1}, o_ref
        #   w_i:     (C_out_i, C_in_i) bf16  BN-scale-folded 1x1-conv weight
        #   shift_i: (C_out_i, 1)      f32   folded shift = beta + (bias-mean)*scale
        o_ref = refs[-1]
        layer_refs = refs[:-1]
        y = x_ref[0]                                        # (C_in, TILE) f32
        for i in range(num_layers):
            w = layer_refs[2 * i][...]                      # bf16
            shift = layer_refs[2 * i + 1][...]              # f32
            y = jnp.dot(w, y.astype(jnp.bfloat16),          # bf16 MXU operands
                        preferred_element_type=jnp.float32)  # f32 accumulate
            y = jnp.maximum(y + shift, 0.0)                 # f32 epilogue
        o_ref[0] = y.astype(o_ref.dtype)
    return kernel


def _pick_tile_hw(hw_pad, channels, budget_bytes=20 << 20):
    """Largest lane tile (multiple of 128 dividing hw_pad) whose activation
    working set fits a conservative VMEM budget (safe on v7x/v5e defaults)."""
    for t in (2048, 1024, 512, 256, 128):
        if t > hw_pad or hw_pad % t != 0:
            continue
        est = 2 * channels[0] * t * 4                # input tile, dbl-buffered f32
        est += 2 * channels[-1] * t * 4              # output tile, dbl-buffered f32
        worst = max(channels[i] + channels[i + 1] for i in range(len(channels) - 1))
        est += worst * t * 6                         # f32 live value + bf16 dot copy
        if est <= budget_bytes:
            return t
    return 128


def pointnet_forward(x_bchw, params, *, eps=1e-5, out_dtype=jnp.float32):
    """Fused SharedMLP forward. x_bchw: (B, C, npoint, nsample) NCHW, f32."""
    b, c, h, w = x_bchw.shape
    hw = h * w
    num_layers = len(params)
    channels = [c] + [int(p["w"].shape[0]) for p in params]
    c_out_last = channels[-1]

    # Fold BN (inference) + conv bias into per-layer (bf16 weight, f32 shift).
    folded = []
    weight_bytes = 0
    for p in params:
        scale = p["gamma"] / jnp.sqrt(p["var"] + eps)              # (C_out,)
        w_f = (p["w"] * scale[:, None]).astype(jnp.bfloat16)       # (C_out, C_in)
        shift = (p["beta"] + (p["bias"] - p["mean"]) * scale)      # (C_out,)
        folded.append((w_f, shift.reshape(-1, 1).astype(jnp.float32)))
        co, ci = p["w"].shape
        weight_bytes += co * ci * 2 + co * 4

    # (B, C, H, W) -> (B, C, HW): free reshape, no HBM transpose round trip.
    x = x_bchw.reshape(b, c, hw).astype(jnp.float32)
    # Pad only to the next multiple of 128 (NOT to a multiple of the tile).
    hw_pad = _round_up(hw, 128)
    if hw_pad != hw:
        x = jnp.pad(x, ((0, 0), (0, 0), (0, hw_pad - hw)))

    tile_hw = _pick_tile_hw(hw_pad, channels)
    grid = (b, hw_pad // tile_hw)   # both axes "parallel" -> v7x TC sharding

    # Explicit VMEM budget: activations + single-buffered weights, 2x headroom,
    # clamped to [32 MiB, 48 MiB] (valid on every generation incl. v7x 64 MiB).
    act_est = (2 * channels[0] + 2 * channels[-1]) * tile_hw * 4
    act_est += max(channels[i] + channels[i + 1]
                   for i in range(num_layers)) * tile_hw * 6
    vmem_limit = int(min(48 << 20, max(32 << 20, 2 * (act_est + weight_bytes))))

    def run(single_buffer_weights):
        in_specs = [pl.BlockSpec((1, c, tile_hw), lambda bi, ti: (bi, 0, ti))]
        operands = [x]
        wkw = {"pipeline_mode": pl.Buffered(1)} if single_buffer_weights else {}
        for (w_f, shift) in folded:
            co, ci = w_f.shape
            in_specs.append(pl.BlockSpec((co, ci), lambda bi, ti: (0, 0), **wkw))
            in_specs.append(pl.BlockSpec((co, 1), lambda bi, ti: (0, 0), **wkw))
            operands.extend([w_f, shift])
        out = pl.pallas_call(
            _make_fused_kernel(num_layers),
            out_shape=jax.ShapeDtypeStruct((b, c_out_last, hw_pad), out_dtype),
            grid_spec=pltpu.PrefetchScalarGridSpec(
                num_scalar_prefetch=0,
                grid=grid,
                in_specs=in_specs,
                out_specs=pl.BlockSpec((1, c_out_last, tile_hw),
                                       lambda bi, ti: (bi, 0, ti)),
            ),
            compiler_params=pltpu.CompilerParams(
                dimension_semantics=("parallel", "parallel"),
                vmem_limit_bytes=vmem_limit),
        )(*operands)
        return jax.block_until_ready(out)

    try:
        out = run(single_buffer_weights=True)    # weights resident, 1 VMEM copy
    except Exception:
        out = run(single_buffer_weights=False)   # fallback: default buffering

    if hw_pad != hw:
        out = out[:, :, :hw]   # only when HW is not already a 128 multiple
    return out.reshape(b, c_out_last, h, w)


# ---------------------------------------------------------------------------
# Parameter construction (deterministic, matches the module's __init__ shapes)
# ---------------------------------------------------------------------------
def init_pointnet_params(key, mlp, *, use_xyz=True):
    """Replicates pointnet.__init__: if use_xyz, mlp[0] += 3; then a SharedMLP
    of Conv2d(1x1) + BatchNorm2d + ReLU for each consecutive channel pair."""
    mlp_spec = list(mlp)
    if use_xyz and len(mlp_spec) > 0:
        mlp_spec[0] += 3
    params = []
    for c_in, c_out in zip(mlp_spec[:-1], mlp_spec[1:]):
        key, k_w, k_b, k_g, k_be, k_m, k_v = jax.random.split(key, 7)
        w = jax.random.normal(k_w, (c_out, c_in), jnp.float32) * 0.1
        bias = jax.random.normal(k_b, (c_out,), jnp.float32) * 0.05
        gamma = 1.0 + 0.1 * jax.random.normal(k_g, (c_out,), jnp.float32)
        beta = 0.05 * jax.random.normal(k_be, (c_out,), jnp.float32)
        run_mean = 0.02 * jax.random.normal(k_m, (c_out,), jnp.float32)
        run_var = 1.0 + 0.1 * jax.random.uniform(k_v, (c_out,), jnp.float32)
        params.append(dict(w=w, bias=bias, gamma=gamma, beta=beta,
                           mean=run_mean, var=run_var))
    return params


# ---------------------------------------------------------------------------
# Pure-JAX reference (Conv1x1 + BN(inference) + ReLU per layer), f32
# ---------------------------------------------------------------------------
def pointnet_reference(x_bchw, params, eps=1e-5):
    y = x_bchw
    for p in params:
        y = jnp.einsum("oc,bchw->bohw", p["w"], y) + p["bias"][None, :, None, None]
        y = (y - p["mean"][None, :, None, None]) / jnp.sqrt(
            p["var"][None, :, None, None] + eps)
        y = y * p["gamma"][None, :, None, None] + p["beta"][None, :, None, None]
        y = jnp.maximum(y, 0.0)
    return y


if __name__ == "__main__":
    key = jax.random.PRNGKey(0)
    k_x, k_p = jax.random.split(key)

    # pointnet(mlp=[1, 32, 64], use_xyz=True) -> in channels = 1 + 3 = 4
    mlp = [1, 32, 64]
    params = init_pointnet_params(k_p, mlp, use_xyz=True)

    # Input: (B, C, npoint, nsample) = (2, 4, 16, 16)
    x = jax.random.normal(k_x, (2, 4, 16, 16), jnp.float32)

    out = jax.block_until_ready(pointnet_forward(x, params))
    ref = jax.block_until_ready(pointnet_reference(x, params))

    assert out.shape == (2, 64, 16, 16), out.shape
    # bf16 MXU operands -> loosened tolerance vs. the f32 reference.
    max_err = float(jnp.max(jnp.abs(out - ref)))
    assert jnp.allclose(out, ref, atol=2e-2, rtol=2e-2), max_err
    print("KERNEL_OK")
</pallas_src>

<mosaic_0001>
module attributes {stable_mosaic.version = 11 : i64} {
  func.func @kernel(%arg0: i32, %arg1: i32, %arg2: memref<1x4x256xf32, #tpu.memory_space<vmem>>, %arg3: memref<32x4xbf16, #tpu.memory_space<vmem>>, %arg4: memref<32x1xf32, #tpu.memory_space<vmem>>, %arg5: memref<64x32xbf16, #tpu.memory_space<vmem>>, %arg6: memref<64x1xf32, #tpu.memory_space<vmem>>, %arg7: memref<1x64x256xf32, #tpu.memory_space<vmem>>) attributes {dimension_semantics = [#tpu.dimension_semantics<parallel>, #tpu.dimension_semantics<parallel>], iteration_bounds = array<i64: 2, 1>, scalar_prefetch = 0 : i64, scratch_operands = 0 : i64, tpu.core_type = #tpu.core_type<tc>, window_params = [{transform_indices = @transform_0, window_bounds = array<i64: 1, 4, 256>}, {pipeline_mode = #tpu.pipeline_mode<synchronous>, transform_indices = @transform_1, window_bounds = array<i64: 32, 4>}, {pipeline_mode = #tpu.pipeline_mode<synchronous>, transform_indices = @transform_2, window_bounds = array<i64: 32, 1>}, {pipeline_mode = #tpu.pipeline_mode<synchronous>, transform_indices = @transform_3, window_bounds = array<i64: 64, 32>}, {pipeline_mode = #tpu.pipeline_mode<synchronous>, transform_indices = @transform_4, window_bounds = array<i64: 64, 1>}, {transform_indices = @transform_5, window_bounds = array<i64: 1, 64, 256>}]} {
    %c0 = arith.constant 0 : index
    %c0_0 = arith.constant 0 : index
    %c0_1 = arith.constant 0 : index
    %0 = vector.load %arg2[%c0, %c0_0, %c0_1] : memref<1x4x256xf32, #tpu.memory_space<vmem>>, vector<1x4x256xf32>
    %1 = vector.shape_cast %0 : vector<1x4x256xf32> to vector<4x256xf32>
    %c0_2 = arith.constant 0 : index
    %c0_3 = arith.constant 0 : index
    %2 = vector.load %arg3[%c0_2, %c0_3] : memref<32x4xbf16, #tpu.memory_space<vmem>>, vector<32x4xbf16>
    %c0_4 = arith.constant 0 : index
    %c0_5 = arith.constant 0 : index
    %3 = vector.load %arg4[%c0_4, %c0_5] : memref<32x1xf32, #tpu.memory_space<vmem>>, vector<32x1xf32>
    %4 = arith.truncf %1 : vector<4x256xf32> to vector<4x256xbf16>
    %cst = arith.constant dense<0.000000e+00> : vector<32x256xf32>
    %5 = tpu.matmul %2, %4, %cst {dimension_numbers = #tpu.dot_dimension_numbers<[1], [0], [0], [1], [0, 0, 1, 1], [], []>} : vector<32x4xbf16>, vector<4x256xbf16>, vector<32x256xf32> -> vector<32x256xf32>
    %6 = vector.broadcast %3 : vector<32x1xf32> to vector<32x256xf32>
    %7 = arith.addf %5, %6 : vector<32x256xf32>
    %cst_6 = arith.constant 0.000000e+00 : f32
    %8 = vector.broadcast %cst_6 : f32 to vector<32x256xf32>
    %9 = arith.maximumf %7, %8 : vector<32x256xf32>
    %c0_7 = arith.constant 0 : index
    %c0_8 = arith.constant 0 : index
    %10 = vector.load %arg5[%c0_7, %c0_8] : memref<64x32xbf16, #tpu.memory_space<vmem>>, vector<64x32xbf16>
    %c0_9 = arith.constant 0 : index
    %c0_10 = arith.constant 0 : index
    %11 = vector.load %arg6[%c0_9, %c0_10] : memref<64x1xf32, #tpu.memory_space<vmem>>, vector<64x1xf32>
    %12 = arith.truncf %9 : vector<32x256xf32> to vector<32x256xbf16>
    %cst_11 = arith.constant dense<0.000000e+00> : vector<64x256xf32>
    %13 = tpu.matmul %10, %12, %cst_11 {dimension_numbers = #tpu.dot_dimension_numbers<[1], [0], [0], [1], [0, 0, 1, 1], [], []>} : vector<64x32xbf16>, vector<32x256xbf16>, vector<64x256xf32> -> vector<64x256xf32>
    %14 = vector.broadcast %11 : vector<64x1xf32> to vector<64x256xf32>
    %15 = arith.addf %13, %14 : vector<64x256xf32>
    %cst_12 = arith.constant 0.000000e+00 : f32
    %16 = vector.broadcast %cst_12 : f32 to vector<64x256xf32>
    %17 = arith.maximumf %15, %16 : vector<64x256xf32>
    %c0_13 = arith.constant 0 : index
    %c0_14 = arith.constant 0 : index
    %c0_15 = arith.constant 0 : index
    %18 = vector.load %arg7[%c0_13, %c0_14, %c0_15] : memref<1x64x256xf32, #tpu.memory_space<vmem>>, vector<1x64x256xf32>
    %19 = vector.shape_cast %18 : vector<1x64x256xf32> to vector<64x256xf32>
    %20 = vector.shape_cast %17 : vector<64x256xf32> to vector<1x64x256xf32>
    tpu.vector_store %arg7[%c0_13, %c0_14, %c0_15], %20 {strides = array<i32>} : memref<1x64x256xf32, #tpu.memory_space<vmem>>, vector<1x64x256xf32>,
    return
  }
  func.func @transform_0(%arg0: i32, %arg1: i32) -> (i32, i32, i32) {
    %c0_i32 = arith.constant 0 : i32
    %c0_i32_0 = arith.constant 0 : i32
    return %arg0, %c0_i32, %arg1 : i32, i32, i32
  }
  func.func @transform_1(%arg0: i32, %arg1: i32) -> (i32, i32) {
    %c0_i32 = arith.constant 0 : i32
    %c0_i32_0 = arith.constant 0 : i32
    %c0_i32_1 = arith.constant 0 : i32
    return %c0_i32, %c0_i32_0 : i32, i32
  }
  func.func @transform_2(%arg0: i32, %arg1: i32) -> (i32, i32) {
    %c0_i32 = arith.constant 0 : i32
    %c0_i32_0 = arith.constant 0 : i32
    %c0_i32_1 = arith.constant 0 : i32
    return %c0_i32, %c0_i32_0 : i32, i32
  }
  func.func @transform_3(%arg0: i32, %arg1: i32) -> (i32, i32) {
    %c0_i32 = arith.constant 0 : i32
    %c0_i32_0 = arith.constant 0 : i32
    %c0_i32_1 = arith.constant 0 : i32
    return %c0_i32, %c0_i32_0 : i32, i32
  }
  func.func @transform_4(%arg0: i32, %arg1: i32) -> (i32, i32) {
    %c0_i32 = arith.constant 0 : i32
    %c0_i32_0 = arith.constant 0 : i32
    %c0_i32_1 = arith.constant 0 : i32
    return %c0_i32, %c0_i32_0 : i32, i32
  }
  func.func @transform_5(%arg0: i32, %arg1: i32) -> (i32, i32, i32) {
    %c0_i32 = arith.constant 0 : i32
    %c0_i32_0 = arith.constant 0 : i32
    return %arg0, %c0_i32, %arg1 : i32, i32, i32
  }
}

module attributes {stable_mosaic.version = 11 : i64} {
  func.func @kernel(%arg0: i32, %arg1: i32, %arg2: memref<1x4x256xf32, #tpu.memory_space<vmem>>, %arg3: memref<32x4xbf16, #tpu.memory_space<vmem>>, %arg4: memref<32x1xf32, #tpu.memory_space<vmem>>, %arg5: memref<64x32xbf16, #tpu.memory_space<vmem>>, %arg6: memref<64x1xf32, #tpu.memory_space<vmem>>, %arg7: memref<1x64x256xf32, #tpu.memory_space<vmem>>) attributes {dimension_semantics = [#tpu.dimension_semantics<parallel>, #tpu.dimension_semantics<parallel>], iteration_bounds = array<i64: 2, 1>, scalar_prefetch = 0 : i64, scratch_operands = 0 : i64, tpu.core_type = #tpu.core_type<tc>, window_params = [{transform_indices = @transform_0, window_bounds = array<i64: 1, 4, 256>}, {pipeline_mode = #tpu.pipeline_mode<synchronous>, transform_indices = @transform_1, window_bounds = array<i64: 32, 4>}, {pipeline_mode = #tpu.pipeline_mode<synchronous>, transform_indices = @transform_2, window_bounds = array<i64: 32, 1>}, {pipeline_mode = #tpu.pipeline_mode<synchronous>, transform_indices = @transform_3, window_bounds = array<i64: 64, 32>}, {pipeline_mode = #tpu.pipeline_mode<synchronous>, transform_indices = @transform_4, window_bounds = array<i64: 64, 1>}, {transform_indices = @transform_5, window_bounds = array<i64: 1, 64, 256>}]} {
    %c0 = arith.constant 0 : index
    %c0_0 = arith.constant 0 : index
    %c0_1 = arith.constant 0 : index
    %0 = vector.load %arg2[%c0, %c0_0, %c0_1] : memref<1x4x256xf32, #tpu.memory_space<vmem>>, vector<1x4x256xf32>
    %1 = vector.shape_cast %0 : vector<1x4x256xf32> to vector<4x256xf32>
    %c0_2 = arith.constant 0 : index
    %c0_3 = arith.constant 0 : index
    %2 = vector.load %arg3[%c0_2, %c0_3] : memref<32x4xbf16, #tpu.memory_space<vmem>>, vector<32x4xbf16>
    %c0_4 = arith.constant 0 : index
    %c0_5 = arith.constant 0 : index
    %3 = vector.load %arg4[%c0_4, %c0_5] : memref<32x1xf32, #tpu.memory_space<vmem>>, vector<32x1xf32>
    %4 = arith.truncf %1 : vector<4x256xf32> to vector<4x256xbf16>
    %cst = arith.constant dense<0.000000e+00> : vector<32x256xf32>
    %5 = tpu.matmul %2, %4, %cst {dimension_numbers = #tpu.dot_dimension_numbers<[1], [0], [0], [1], [0, 0, 1, 1], [], []>} : vector<32x4xbf16>, vector<4x256xbf16>, vector<32x256xf32> -> vector<32x256xf32>
    %6 = vector.broadcast %3 : vector<32x1xf32> to vector<32x256xf32>
    %7 = arith.addf %5, %6 : vector<32x256xf32>
    %cst_6 = arith.constant 0.000000e+00 : f32
    %8 = vector.broadcast %cst_6 : f32 to vector<32x256xf32>
    %9 = arith.maximumf %7, %8 : vector<32x256xf32>
    %c0_7 = arith.constant 0 : index
    %c0_8 = arith.constant 0 : index
    %10 = vector.load %arg5[%c0_7, %c0_8] : memref<64x32xbf16, #tpu.memory_space<vmem>>, vector<64x32xbf16>
    %c0_9 = arith.constant 0 : index
    %c0_10 = arith.constant 0 : index
    %11 = vector.load %arg6[%c0_9, %c0_10] : memref<64x1xf32, #tpu.memory_space<vmem>>, vector<64x1xf32>
    %12 = arith.truncf %9 : vector<32x256xf32> to vector<32x256xbf16>
    %cst_11 = arith.constant dense<0.000000e+00> : vector<64x256xf32>
    %13 = tpu.matmul %10, %12, %cst_11 {dimension_numbers = #tpu.dot_dimension_numbers<[1], [0], [0], [1], [0, 0, 1, 1], [], []>} : vector<64x32xbf16>, vector<32x256xbf16>, vector<64x256xf32> -> vector<64x256xf32>
    %14 = vector.broadcast %11 : vector<64x1xf32> to vector<64x256xf32>
    %15 = arith.addf %13, %14 : vector<64x256xf32>
    %cst_12 = arith.constant 0.000000e+00 : f32
    %16 = vector.broadcast %cst_12 : f32 to vector<64x256xf32>
    %17 = arith.maximumf %15, %16 : vector<64x256xf32>
    %c0_13 = arith.constant 0 : index
    %c0_14 = arith.constant 0 : index
    %c0_15 = arith.constant 0 : index
    %18 = vector.load %arg7[%c0_13, %c0_14, %c0_15] : memref<1x64x256xf32, #tpu.memory_space<vmem>>, vector<1x64x256xf32>
    %19 = vector.shape_cast %18 : vector<1x64x256xf32> to vector<64x256xf32>
    %20 = vector.shape_cast %17 : vector<64x256xf32> to vector<1x64x256xf32>
    tpu.vector_store %arg7[%c0_13, %c0_14, %c0_15], %20 {strides = array<i32>} : memref<1x64x256xf32, #tpu.memory_space<vmem>>, vector<1x64x256xf32>,
    return
  }
  func.func @transform_0(%arg0: i32, %arg1: i32) -> (i32, i32, i32) {
    %c0_i32 = arith.constant 0 : i32
    %c0_i32_0 = arith.constant 0 : i32
    return %arg0, %c0_i32, %arg1 : i32, i32, i32
  }
  func.func @transform_1(%arg0: i32, %arg1: i32) -> (i32, i32) {
    %c0_i32 = arith.constant 0 : i32
    %c0_i32_0 = arith.constant 0 : i32
    %c0_i32_1 = arith.constant 0 : i32
    return %c0_i32, %c0_i32_0 : i32, i32
  }
  func.func @transform_2(%arg0: i32, %arg1: i32) -> (i32, i32) {
    %c0_i32 = arith.constant 0 : i32
    %c0_i32_0 = arith.constant 0 : i32
    %c0_i32_1 = arith.constant 0 : i32
    return %c0_i32, %c0_i32_0 : i32, i32
  }
  func.func @transform_3(%arg0: i32, %arg1: i32) -> (i32, i32) {
    %c0_i32 = arith.constant 0 : i32
    %c0_i32_0 = arith.constant 0 : i32
    %c0_i32_1 = arith.constant 0 : i32
    return %c0_i32, %c0_i32_0 : i32, i32
  }
  func.func @transform_4(%arg0: i32, %arg1: i32) -> (i32, i32) {
    %c0_i32 = arith.constant 0 : i32
    %c0_i32_0 = arith.constant 0 : i32
    %c0_i32_1 = arith.constant 0 : i32
    return %c0_i32, %c0_i32_0 : i32, i32
  }
  func.func @transform_5(%arg0: i32, %arg1: i32) -> (i32, i32, i32) {
    %c0_i32 = arith.constant 0 : i32
    %c0_i32_0 = arith.constant 0 : i32
    return %arg0, %c0_i32, %arg1 : i32, i32, i32
  }
}

</mosaic_0001>

<llo_original>
// kernel: tpu_custom_call.1
$region0: #{tpu_custom_call.1}
  #allocation0 [shape = 'u32[]', space=smem, size = 0x4, offset = 0x4, fixed_abs, tag = 'smem constant byte address 0x4 - core index']
  #allocation1 [shape = 'u32[144,128]{1,0:T(1,128)}', space=vmem, size = 0x12000, scoped, tag = 'internal scratch']
  %s0 = inlined_call_operand.vmem [shape: f32[2,4,256], index: 0, kind: input, shape index: {}]
  %s1 = inlined_call_operand.vmem [shape: bf16[32,4], index: 1, kind: input, shape index: {}]
  %s2 = inlined_call_operand.vmem [shape: f32[32,1], index: 2, kind: input, shape index: {}]
  %s3 = inlined_call_operand.vmem [shape: bf16[64,32], index: 3, kind: input, shape index: {}]
  %s4 = inlined_call_operand.vmem [shape: f32[64,1], index: 4, kind: input, shape index: {}]
  %s5 = inlined_call_operand.hbm [shape: f32[2,64,256], index: 5, kind: output, shape index: {}]
  %s6 = sld [smem:[#allocation0]]
  $region53: #{tpu_custom_call.1} parent=0
    _
  %s8 = ssub.s32 1, %s6
  %s9 = scalar_select 0, %s8, %s6
  $region1: #{tpu_custom_call.1} parent=0
    #allocation2 [shape = 'u8[131072]{0}', space=vmem, size = 0x20000, scoped, tag = 'output window, operand 0']
    #allocation3 [shape = 's32[2]{0}', space=sflag, size = 0x8, scoped, tag = 'scoped memory for tpu_custom_call.1']
    %10 = vsyncpa [#allocation3], 0
    %s11 = scalar_lea.sflag [#allocation3], 1
    %12 = vsyncpa %s11, 0
    loop: start=0, step=1, limit=4
    $region2: #{tpu_custom_call.1} parent=1 // loop_pre_header
      _
    $region3: #{tpu_custom_call.1} parent=1 // loop_header
      %s14 = sphi 0, %s18
      %p15 = scmp.ge.s32.totalorder %s14, 4
      %s21 = sphi 0, %s33
      %s22 = sphi 0, %s29
      %s23 = sphi 0, %s21
      %s24 = sphi 0, %s22
      %s25 = sphi 0, %s23
      %s26 = sphi 0, %s24
      %s38 = sphi 0, %s40
      %s41 = sphi 0, %s38
      %s42 = sphi 0, %s41
      %s58 = sphi 0, %s42
      %s62 = sphi 0, %s62
      %s64 = sphi 0, %s62
      %s65 = sphi 0, %s64
      %s79 = sphi 0, %s65
      %s83 = sphi 0, %s83
      %s85 = sphi 0, %s83
      %s86 = sphi 0, %s85
      %s100 = sphi 0, %s86
      %s104 = sphi 0, %s104
      %s106 = sphi 0, %s104
      %s107 = sphi 0, %s106
      %s121 = sphi 0, %s107
      %s125 = sphi 0, %s125
      %s127 = sphi 0, %s125
      %s128 = sphi 0, %s127
      %s142 = sphi 0, %s128
      %s150 = sphi 0, %s152
      %s153 = sphi 0, %s150
      %s154 = sphi 0, %s153
      %s170 = sphi 0, %s154
    $region4: #{tpu_custom_call.1} parent=1 // loop_header_branch
      %17 = sbr.rel (%p15) target = $region8
    $region5: #{tpu_custom_call.1} parent=1 // loop_body
      %s19 = ssub.s32 %s14, 1
      %s20 = ssub.s32 %s14, 2
      %s27 = sadd.s32 1, %s22
      %p28 = scmp.ge.s32.totalorder %s27, 1
      %s29 = scalar_select %p28, 0, %s27
      %s30 = sadd.s32 1, %s21
      %s31 = scalar_select %p28, %s30, %s21
      %p32 = scmp.ge.s32.totalorder %s31, 2
      %s33 = scalar_select %p32, 0, %s31
      %s34 = ssub.s32 %s21, %s33
      %s35 = ssub.s32 %s22, %s29
      %s36 = sor.u32 %s34, %s35
      %p37 = scmp.eq.s32.totalorder %s36, 0
      %s39 = sadd.s32 %s38, 1
      %s40 = scalar_select %p37, %s38, %s39
      %p43 = pneg %p37
      %p44 = scmp.eq.s32.totalorder %s14, 1
      %p45 = por %p43, %p44
      %p46 = scmp.ne.s32.totalorder %s38, %s41
      %p47 = scmp.eq.s32.totalorder %s14, 0
      %p48 = por %p46, %p47
      %p49 = scmp.ne.s32.totalorder %s38, %s41
      %p50 = scmp.eq.s32.totalorder %s19, 1
      %p51 = por %p49, %p50
      %p52 = scmp.ne.s32.totalorder %s41, %s42
      %p53 = scmp.eq.s32.totalorder %s19, 0
      %p54 = por %p52, %p53
      %p55 = scmp.ne.s32.totalorder %s41, %s42
      %p56 = scmp.eq.s32.totalorder %s20, 1
      %p57 = por %p55, %p56
      %p59 = scmp.ne.s32.totalorder %s42, %s58
      %p60 = scmp.eq.s32.totalorder %s20, 0
      %p61 = por %p59, %p60
      %s63 = sadd.s32 %s62, 1
      %p66 = scmp.eq.s32.totalorder %s14, 1
      %p67 = scmp.ne.s32.totalorder %s62, %s64
      %p68 = scmp.eq.s32.totalorder %s14, 0
      %p69 = por %p67, %p68
      %p70 = scmp.ne.s32.totalorder %s62, %s64
      %p71 = scmp.eq.s32.totalorder %s19, 1
      %p72 = por %p70, %p71
      %p73 = scmp.ne.s32.totalorder %s64, %s65
      %p74 = scmp.eq.s32.totalorder %s19, 0
      %p75 = por %p73, %p74
      %p76 = scmp.ne.s32.totalorder %s64, %s65
      %p77 = scmp.eq.s32.totalorder %s20, 1
      %p78 = por %p76, %p77
      %p80 = scmp.ne.s32.totalorder %s65, %s79
      %p81 = scmp.eq.s32.totalorder %s20, 0
      %p82 = por %p80, %p81
      %s84 = sadd.s32 %s83, 1
      %p87 = scmp.eq.s32.totalorder %s14, 1
      %p88 = scmp.ne.s32.totalorder %s83, %s85
      %p89 = scmp.eq.s32.totalorder %s14, 0
      %p90 = por %p88, %p89
      %p91 = scmp.ne.s32.totalorder %s83, %s85
      %p92 = scmp.eq.s32.totalorder %s19, 1
      %p93 = por %p91, %p92
      %p94 = scmp.ne.s32.totalorder %s85, %s86
      %p95 = scmp.eq.s32.totalorder %s19, 0
      %p96 = por %p94, %p95
      %p97 = scmp.ne.s32.totalorder %s85, %s86
      %p98 = scmp.eq.s32.totalorder %s20, 1
      %p99 = por %p97, %p98
      %p101 = scmp.ne.s32.totalorder %s86, %s100
      %p102 = scmp.eq.s32.totalorder %s20, 0
      %p103 = por %p101, %p102
      %s105 = sadd.s32 %s104, 1
      %p108 = scmp.eq.s32.totalorder %s14, 1
      %p109 = scmp.ne.s32.totalorder %s104, %s106
      %p110 = scmp.eq.s32.totalorder %s14, 0
      %p111 = por %p109, %p110
      %p112 = scmp.ne.s32.totalorder %s104, %s106
      %p113 = scmp.eq.s32.totalorder %s19, 1
      %p114 = por %p112, %p113
      %p115 = scmp.ne.s32.totalorder %s106, %s107
      %p116 = scmp.eq.s32.totalorder %s19, 0
      %p117 = por %p115, %p116
      %p118 = scmp.ne.s32.totalorder %s106, %s107
      %p119 = scmp.eq.s32.totalorder %s20, 1
      %p120 = por %p118, %p119
      %p122 = scmp.ne.s32.totalorder %s107, %s121
      %p123 = scmp.eq.s32.totalorder %s20, 0
      %p124 = por %p122, %p123
      %s126 = sadd.s32 %s125, 1
      %p129 = scmp.eq.s32.totalorder %s14, 1
      %p130 = scmp.ne.s32.totalorder %s125, %s127
      %p131 = scmp.eq.s32.totalorder %s14, 0
      %p132 = por %p130, %p131
      %p133 = scmp.ne.s32.totalorder %s125, %s127
      %p134 = scmp.eq.s32.totalorder %s19, 1
      %p135 = por %p133, %p134
      %p136 = scmp.ne.s32.totalorder %s127, %s128
      %p137 = scmp.eq.s32.totalorder %s19, 0
      %p138 = por %p136, %p137
      %p139 = scmp.ne.s32.totalorder %s127, %s128
      %p140 = scmp.eq.s32.totalorder %s20, 1
      %p141 = por %p139, %p140
      %p143 = scmp.ne.s32.totalorder %s128, %s142
      %p144 = scmp.eq.s32.totalorder %s20, 0
      %p145 = por %p143, %p144
      %s146 = ssub.s32 %s21, %s33
      %s147 = ssub.s32 %s22, %s29
      %s148 = sor.u32 %s146, %s147
      %p149 = scmp.eq.s32.totalorder %s148, 0
      %s151 = sadd.s32 %s150, 1
      %s152 = scalar_select %p149, %s150, %s151
      %p155 = pneg %p149
      %p156 = scmp.eq.s32.totalorder %s14, 1
      %p157 = por %p155, %p156
      %p158 = scmp.ne.s32.totalorder %s150, %s153
      %p159 = scmp.eq.s32.totalorder %s14, 0
      %p160 = por %p158, %p159
      %p161 = scmp.ne.s32.totalorder %s150, %s153
      %p162 = scmp.eq.s32.totalorder %s19, 1
      %p163 = por %p161, %p162
      %p164 = scmp.ne.s32.totalorder %s153, %s154
      %p165 = scmp.eq.s32.totalorder %s19, 0
      %p166 = por %p164, %p165
      %p167 = scmp.ne.s32.totalorder %s153, %s154
      %p168 = scmp.eq.s32.totalorder %s20, 1
      %p169 = por %p167, %p168
      %p171 = scmp.ne.s32.totalorder %s154, %s170
      %p172 = scmp.eq.s32.totalorder %s20, 0
      %p173 = por %p171, %p172
      %p174 = scmp.le.s32.totalorder 1, %s14
      %p175 = scmp.lt.s32.totalorder %s14, 3
      %p176 = pnand %p174, %p175
      %p177 = pneg %p176
      // Predicated region
      $region9: #{tpu_custom_call.1} parent=5 // pred_check
        _
      $region10: #{tpu_custom_call.1} parent=5 // pred_check_branch
        %179 = sbr.rel (%p176) target = $region12
      $region11: #{tpu_custom_call.1} parent=5 // pred_region
        %s180 = ssub.s32 %s14, 1
        // Predicated region
        $region13: #{tpu_custom_call.1} parent=11 // pred_check
          %p181 = pneg %p75
        $region14: #{tpu_custom_call.1} parent=11 // pred_check_branch
          %183 = sbr.rel (%p181) target = $region16
        $region15: #{tpu_custom_call.1} parent=11 // pred_region
          _
        $region16: #{tpu_custom_call.1} parent=11 // pred_fallthru
          _
        // Predicated region
        $region17: #{tpu_custom_call.1} parent=11 // pred_check
          %p184 = pneg %p96
        $region18: #{tpu_custom_call.1} parent=11 // pred_check_branch
          %186 = sbr.rel (%p184) target = $region20
        $region19: #{tpu_custom_call.1} parent=11 // pred_region
          _
        $region20: #{tpu_custom_call.1} parent=11 // pred_fallthru
          _
        // Predicated region
        $region21: #{tpu_custom_call.1} parent=11 // pred_check
          %p187 = pneg %p117
        $region22: #{tpu_custom_call.1} parent=11 // pred_check_branch
          %189 = sbr.rel (%p187) target = $region24
        $region23: #{tpu_custom_call.1} parent=11 // pred_region
          _
        $region24: #{tpu_custom_call.1} parent=11 // pred_fallthru
          _
        // Predicated region
        $region25: #{tpu_custom_call.1} parent=11 // pred_check
          %p190 = pneg %p138
        $region26: #{tpu_custom_call.1} parent=11 // pred_check_branch
          %192 = sbr.rel (%p190) target = $region28
        $region27: #{tpu_custom_call.1} parent=11 // pred_region
          _
        $region28: #{tpu_custom_call.1} parent=11 // pred_fallthru
          _
      $region12: #{tpu_custom_call.1} parent=5 // pred_fallthru
        _
      %p193 = scmp.lt.s32.totalorder %s14, 2
      // Predicated region
      $region29: #{tpu_custom_call.1} parent=5 // pred_check
        %p194 = pneg %p193
      $region30: #{tpu_custom_call.1} parent=5 // pred_check_branch
        %196 = sbr.rel (%p194) target = $region32
      $region31: #{tpu_custom_call.1} parent=5 // pred_region
        // Predicated region
        $region33: #{tpu_custom_call.1} parent=31 // pred_check
          %p197 = pneg %p48
        $region34: #{tpu_custom_call.1} parent=31 // pred_check_branch
          %199 = sbr.rel (%p197) target = $region36
        $region35: #{tpu_custom_call.1} parent=31 // pred_region
          %s200 = smul.u32 2, %s22
          %p201 = scmp.lt.s32.totalorder %s21, 1
          %s202 = scalar_select %p201, %s21, 1
          %p203 = scmp.lt.s32.totalorder %s200, 1
          %s204 = scalar_select %p203, %s200, 1
          %s205 = smul.addr %s202, 2
          %s206 = sadd.s32 %s204, %s205
          %s207 = smul.addr %s206, 4
          %s208 = scalar_lea.vmem %s0, %s207
          %s209 = smul.u32 2, %s22
        $region36: #{tpu_custom_call.1} parent=31 // pred_fallthru
          _
      $region32: #{tpu_custom_call.1} parent=5 // pred_fallthru
        _
      %p210 = scmp.le.s32.totalorder 1, %s14
      %p211 = scmp.lt.s32.totalorder %s14, 3
      %p212 = pnand %p210, %p211
      %p213 = pneg %p212
      // Predicated region
      $region37: #{tpu_custom_call.1} parent=5 // pred_check
        _
      $region38: #{tpu_custom_call.1} parent=5 // pred_check_branch
        %215 = sbr.rel (%p212) target = $region40
      $region39: #{tpu_custom_call.1} parent=5 // pred_region
        %s216 = ssub.s32 %s14, 1
        %s217 = smul.u32 2, %s24
        %p218 = scmp.lt.s32.totalorder %s23, 1
        %s219 = scalar_select %p218, %s23, 1
        %p220 = scmp.lt.s32.totalorder %s217, 1
        %s221 = scalar_select %p220, %s217, 1
        %s222 = smul.addr %s219, 2
        %s223 = sadd.s32 %s221, %s222
        %s224 = smul.addr %s223, 4
        %s225 = scalar_lea.vmem %s0, %s224
        %p226 = pneg %p54
        %p227 = pneg %p51
        %p228 = pneg %p75
        %p229 = pneg %p72
        %p230 = pneg %p96
        %p231 = pneg %p93
        %p232 = pneg %p117
        %p233 = pneg %p114
        %p234 = pneg %p138
        %p235 = pneg %p135
        %p236 = pneg %p166
        %p237 = pneg %p163
        %s238 = sand.u32 %s153, 1
        %s239 = scalar_lea.sflag [#allocation3], %s238
        %s240 = sand.u32 %s153, 1
        %s241 = smul.addr %s240, 128
        %s242 = scalar_lea.vmem [#allocation2], %s241
        %s243 = smul.u32 2, %s24
        %p244 = scmp.lt.s32.totalorder %s23, 1
        %s245 = scalar_select %p244, %s23, 1
        %p246 = scmp.lt.s32.totalorder %s243, 1
        %s247 = scalar_select %p246, %s243, 1
        %s248 = smul.addr %s245, 2
        %s249 = sadd.s32 %s247, %s248
        %s250 = smul.addr %s249, 4
        %s251 = scalar_lea.vmem %s0, %s250
        %s252 = smul.u32 2, %s24
        %s253 = smul.u32 2, %s24
        %v255 = vld [vmem:[%s251] sm:$0xff]
        %v256 = vld [vmem:[%s1] sm:$0xf]
        %v257 = vld [vmem:[%s1 + $0x4] sm:$0xf]
        %v258 = vld [vmem:[%s1 + $0x8] sm:$0xf]
        %v259 = vld [vmem:[%s1 + $0xc] sm:$0xf]
        %v260 = vld [vmem:[%s2] sm:$0xff]
        %v261 = vld [vmem:[%s2 + $0x8] sm:$0xff]
        %v262 = vld [vmem:[%s2 + $0x10] sm:$0xff]
        %v263 = vld [vmem:[%s2 + $0x18] sm:$0xff]
        %v265 = vcombine.high %v255, %v255
        %v267 = vpack.c.bf16 %v255, %v255
        %v268 = vpack.c.bf16 %v265, %v265
        %270 = vset.pattern.permute.xlu0 0
        %271 = vperm.xlu0 %270, %v260
        %v272 = vpop.permute.xlu0 %271
        %275 = vset.pattern.permute.xlu0 0
        %276 = vperm.xlu0 %275, %v261
        %v277 = vpop.permute.xlu0 %276
        %280 = vset.pattern.permute.xlu0 0
        %281 = vperm.xlu0 %280, %v262
        %v282 = vpop.permute.xlu0 %281
        %285 = vset.pattern.permute.xlu0 0
        %286 = vperm.xlu0 %285, %v263
        %v287 = vpop.permute.xlu0 %286
        %v293 = vunpack.c.l.b16 %v256
        %v294 = vunpack.c.l.b16 %v257
        %v295 = vunpack.c.l.b16 %v258
        %v296 = vunpack.c.l.b16 %v259
        %v297 = vpack.c.b16 %v294, %v293
        %v298 = vpack.c.b16 %v296, %v295
        %vm299 = vcmask 31744
        %v301 = vsel %vm299, %v297, 0
        %v304 = vsel %vm299, %v298, 0
        %vm306 = vcmask 1041408
        %v308 = vsel %vm306, %v267, 0
        %v311 = vsel %vm306, %v268, 0
        %313 = vmatprep.subr.bf16.mxu0 %v311
        %314 = vmatpush1.bf16.msra.mxu0 %v308
        %315 = vmatprep.subr.bf16.mxu0 0
        %316 = vmatpush1.bf16.msra.mxu0 0
        %317 = vmatprep.subr.bf16.mxu0 0
        %318 = vmatpush1.bf16.msra.mxu0 0
        %319 = vmatprep.subr.bf16.mxu0 0
        %320 = vmatpush1.bf16.msra.mxu0 0
        %321 = vmatprep.subr.bf16.mxu0 0
        %322 = vmatpush1.bf16.msra.mxu0 0
        %323 = vmatprep.subr.bf16.mxu0 0
        %324 = vmatpush1.bf16.msra.mxu0 0
        %325 = vmatprep.subr.bf16.mxu0 0
        %326 = vmatpush1.bf16.msra.mxu0 0
        %327 = vmatprep.subr.bf16.mxu0 0
        %328 = vmatpush1.bf16.msra.mxu0 0
        %329 = vmatprep.subr.bf16.mxu0 0
        %330 = vmatpush1.bf16.msra.mxu0 0
        %331 = vmatprep.subr.bf16.mxu0 0
        %332 = vmatpush1.bf16.msra.mxu0 0
        %333 = vmatprep.subr.bf16.mxu0 0
        %334 = vmatpush1.bf16.msra.mxu0 0
        %335 = vmatprep.subr.bf16.mxu0 0
        %336 = vmatpush1.bf16.msra.mxu0 0
        %337 = vmatprep.subr.bf16.mxu0 0
        %338 = vmatpush1.bf16.msra.mxu0 0
        %339 = vmatprep.subr.bf16.mxu0 0
        %340 = vmatpush1.bf16.msra.mxu0 0
        %341 = vmatprep.subr.bf16.mxu0 0
        %342 = vmatpush1.bf16.msra.mxu0 0
        %343 = vmatprep.subr.bf16.mxu0 0
        %344 = vmatpush1.bf16.msra.mxu0 0
        %345 = vmatprep.mubr.bf16.mxu0 0
        %346 = vmatmul.mubr.bf16.gmra.mrb[0].mxu0 %v301
        %v347 = vpop.f32.mrb[0].mxu0
        %v348 = vadd.f32 %v272, %v347
        %v349 = vpop.f32.mrb[0].mxu0
        %v350 = vadd.f32 %v272, %v349
        %v351 = vpop.f32.mrb[0].mxu0
        %v352 = vadd.f32 %v277, %v351
        %v353 = vpop.f32.mrb[0].mxu0
        %v354 = vadd.f32 %v277, %v353
        %355 = vmatprep.mubr.bf16.mxu0 0
        %356 = vmatmul.mubr.bf16.gmra.mrb[0].mxu0 %v304
        %v357 = vpop.f32.mrb[0].mxu0
        %v358 = vadd.f32 %v282, %v357
        %v359 = vpop.f32.mrb[0].mxu0
        %v360 = vadd.f32 %v282, %v359
        %v361 = vpop.f32.mrb[0].mxu0
        %v362 = vadd.f32 %v287, %v361
        %v363 = vpop.f32.mrb[0].mxu0
        %v364 = vadd.f32 %v287, %v363
        %365 = vdwg.mxu0
        %v366 = vmax.f32 %v348, 0.0
        %v367 = vmax.f32 %v350, 0.0
        %v368 = vmax.f32 %v352, 0.0
        %v369 = vmax.f32 %v354, 0.0
        %v370 = vmax.f32 %v358, 0.0
        %v371 = vmax.f32 %v360, 0.0
        %v372 = vmax.f32 %v362, 0.0
        %v373 = vmax.f32 %v364, 0.0
        %v374 = vld [vmem:[%s3] sm:$0xf]
        %v375 = vld [vmem:[%s3 + $0x4] sm:$0xf]
        %v376 = vld [vmem:[%s3 + $0x8] sm:$0xf]
        %v377 = vld [vmem:[%s3 + $0xc] sm:$0xf]
        %v378 = vld [vmem:[%s3 + $0x10] sm:$0xf]
        %v379 = vld [vmem:[%s3 + $0x14] sm:$0xf]
        %v380 = vld [vmem:[%s3 + $0x18] sm:$0xf]
        %v381 = vld [vmem:[%s3 + $0x1c] sm:$0xf]
        %v382 = vld [vmem:[%s4] sm:$0xff]
        %v383 = vld [vmem:[%s4 + $0x8] sm:$0xff]
        %v384 = vld [vmem:[%s4 + $0x10] sm:$0xff]
        %v385 = vld [vmem:[%s4 + $0x18] sm:$0xff]
        %v386 = vld [vmem:[%s4 + $0x20] sm:$0xff]
        %v387 = vld [vmem:[%s4 + $0x28] sm:$0xff]
        %v388 = vld [vmem:[%s4 + $0x30] sm:$0xff]
        %v389 = vld [vmem:[%s4 + $0x38] sm:$0xff]
        %v390 = vpack.c.bf16 %v368, %v366
        %v391 = vpack.c.bf16 %v369, %v367
        %v392 = vpack.c.bf16 %v372, %v370
        %v393 = vpack.c.bf16 %v373, %v371
        %395 = vset.pattern.permute.xlu0 0
        %396 = vperm.xlu0 %395, %v382
        %v397 = vpop.permute.xlu0 %396
        %400 = vset.pattern.permute.xlu0 0
        %401 = vperm.xlu0 %400, %v383
        %v402 = vpop.permute.xlu0 %401
        %405 = vset.pattern.permute.xlu0 0
        %406 = vperm.xlu0 %405, %v384
        %v407 = vpop.permute.xlu0 %406
        %410 = vset.pattern.permute.xlu0 0
        %411 = vperm.xlu0 %410, %v385
        %v412 = vpop.permute.xlu0 %411
        %415 = vset.pattern.permute.xlu0 0
        %416 = vperm.xlu0 %415, %v386
        %v417 = vpop.permute.xlu0 %416
        %420 = vset.pattern.permute.xlu0 0
        %421 = vperm.xlu0 %420, %v387
        %v422 = vpop.permute.xlu0 %421
        %425 = vset.pattern.permute.xlu0 0
        %426 = vperm.xlu0 %425, %v388
        %v427 = vpop.permute.xlu0 %426
        %430 = vset.pattern.permute.xlu0 0
        %431 = vperm.xlu0 %430, %v389
        %v432 = vpop.permute.xlu0 %431
        %v442 = vunpack.c.l.b16 %v374
        %v443 = vunpack.c.l.b16 %v375
        %v444 = vunpack.c.l.b16 %v376
        %v445 = vunpack.c.l.b16 %v377
        %v446 = vunpack.c.l.b16 %v378
        %v447 = vunpack.c.l.b16 %v379
        %v448 = vunpack.c.l.b16 %v380
        %v449 = vunpack.c.l.b16 %v381
        %v450 = vpack.c.b16 %v443, %v442
        %v451 = vpack.c.b16 %v445, %v444
        %v452 = vpack.c.b16 %v447, %v446
        %v453 = vpack.c.b16 %v449, %v448
        %vm454 = vcmask 261120
        %v456 = vsel %vm454, %v450, 0
        %v459 = vsel %vm454, %v451, 0
        %v462 = vsel %vm454, %v452, 0
        %v465 = vsel %vm454, %v453, 0
        %467 = vmatprep.subr.bf16.mxu0 %v391
        %468 = vmatpush1.bf16.msra.mxu0 %v390
        %469 = vmatprep.subr.bf16.mxu0 %v393
        %470 = vmatpush1.bf16.msra.mxu0 %v392
        %471 = vmatprep.subr.bf16.mxu0 0
        %472 = vmatpush1.bf16.msra.mxu0 0
        %473 = vmatprep.subr.bf16.mxu0 0
        %474 = vmatpush1.bf16.msra.mxu0 0
        %475 = vmatprep.subr.bf16.mxu0 0
        %476 = vmatpush1.bf16.msra.mxu0 0
        %477 = vmatprep.subr.bf16.mxu0 0
        %478 = vmatpush1.bf16.msra.mxu0 0
        %479 = vmatprep.subr.bf16.mxu0 0
        %480 = vmatpush1.bf16.msra.mxu0 0
        %481 = vmatprep.subr.bf16.mxu0 0
        %482 = vmatpush1.bf16.msra.mxu0 0
        %483 = vmatprep.subr.bf16.mxu0 0
        %484 = vmatpush1.bf16.msra.mxu0 0
        %485 = vmatprep.subr.bf16.mxu0 0
        %486 = vmatpush1.bf16.msra.mxu0 0
        %487 = vmatprep.subr.bf16.mxu0 0
        %488 = vmatpush1.bf16.msra.mxu0 0
        %489 = vmatprep.subr.bf16.mxu0 0
        %490 = vmatpush1.bf16.msra.mxu0 0
        %491 = vmatprep.subr.bf16.mxu0 0
        %492 = vmatpush1.bf16.msra.mxu0 0
        %493 = vmatprep.subr.bf16.mxu0 0
        %494 = vmatpush1.bf16.msra.mxu0 0
        %495 = vmatprep.subr.bf16.mxu0 0
        %496 = vmatpush1.bf16.msra.mxu0 0
        %497 = vmatprep.subr.bf16.mxu0 0
        %498 = vmatpush1.bf16.msra.mxu0 0
        %499 = vmatprep.mubr.bf16.mxu0 0
        %500 = vmatmul.mubr.bf16.gmra.mrb[0].mxu0 %v456
        %v501 = vpop.f32.mrb[0].mxu0
        %v502 = vadd.f32 %v397, %v501
        %v503 = vpop.f32.mrb[0].mxu0
        %v504 = vadd.f32 %v397, %v503
        %v505 = vpop.f32.mrb[0].mxu0
        %v506 = vadd.f32 %v402, %v505
        %v507 = vpop.f32.mrb[0].mxu0
        %v508 = vadd.f32 %v402, %v507
        %509 = vmatprep.mubr.bf16.mxu0 0
        %510 = vmatmul.mubr.bf16.gmra.mrb[0].mxu0 %v459
        %v511 = vpop.f32.mrb[0].mxu0
        %v512 = vadd.f32 %v407, %v511
        %v513 = vpop.f32.mrb[0].mxu0
        %v514 = vadd.f32 %v407, %v513
        %v515 = vpop.f32.mrb[0].mxu0
        %v516 = vadd.f32 %v412, %v515
        %v517 = vpop.f32.mrb[0].mxu0
        %v518 = vadd.f32 %v412, %v517
        %519 = vmatprep.mubr.bf16.mxu0 0
        %520 = vmatmul.mubr.bf16.gmra.mrb[0].mxu0 %v462
        %v521 = vpop.f32.mrb[0].mxu0
        %v522 = vadd.f32 %v417, %v521
        %v523 = vpop.f32.mrb[0].mxu0
        %v524 = vadd.f32 %v417, %v523
        %v525 = vpop.f32.mrb[0].mxu0
        %v526 = vadd.f32 %v422, %v525
        %v527 = vpop.f32.mrb[0].mxu0
        %v528 = vadd.f32 %v422, %v527
        %529 = vmatprep.mubr.bf16.mxu0 0
        %530 = vmatmul.mubr.bf16.gmra.mrb[0].mxu0 %v465
        %v531 = vpop.f32.mrb[0].mxu0
        %v532 = vadd.f32 %v427, %v531
        %v533 = vpop.f32.mrb[0].mxu0
        %v534 = vadd.f32 %v427, %v533
        %v535 = vpop.f32.mrb[0].mxu0
        %v536 = vadd.f32 %v432, %v535
        %v537 = vpop.f32.mrb[0].mxu0
        %v538 = vadd.f32 %v432, %v537
        %539 = vdwg.mxu0
        %v540 = vmax.f32 %v502, 0.0
        %v541 = vmax.f32 %v504, 0.0
        %v542 = vmax.f32 %v506, 0.0
        %v543 = vmax.f32 %v508, 0.0
        %v544 = vmax.f32 %v512, 0.0
        %v545 = vmax.f32 %v514, 0.0
        %v546 = vmax.f32 %v516, 0.0
        %v547 = vmax.f32 %v518, 0.0
        %v548 = vmax.f32 %v522, 0.0
        %v549 = vmax.f32 %v524, 0.0
        %v550 = vmax.f32 %v526, 0.0
        %v551 = vmax.f32 %v528, 0.0
        %v552 = vmax.f32 %v532, 0.0
        %v553 = vmax.f32 %v534, 0.0
        %v554 = vmax.f32 %v536, 0.0
        %v555 = vmax.f32 %v538, 0.0
        %556 = vst [vmem:[%s242] sm:$0xff] %v540
        %557 = vst [vmem:[%s242 + $0x8] sm:$0xff] %v541
        %558 = vst [vmem:[%s242 + $0x10] sm:$0xff] %v542
        %559 = vst [vmem:[%s242 + $0x18] sm:$0xff] %v543
        %560 = vst [vmem:[%s242 + $0x20] sm:$0xff] %v544
        %561 = vst [vmem:[%s242 + $0x28] sm:$0xff] %v545
        %562 = vst [vmem:[%s242 + $0x30] sm:$0xff] %v546
        %563 = vst [vmem:[%s242 + $0x38] sm:$0xff] %v547
        %564 = vst [vmem:[%s242 + $0x40] sm:$0xff] %v548
        %565 = vst [vmem:[%s242 + $0x48] sm:$0xff] %v549
        %566 = vst [vmem:[%s242 + $0x50] sm:$0xff] %v550
        %567 = vst [vmem:[%s242 + $0x58] sm:$0xff] %v551
        %568 = vst [vmem:[%s242 + $0x60] sm:$0xff] %v552
        %569 = vst [vmem:[%s242 + $0x68] sm:$0xff] %v553
        %570 = vst [vmem:[%s242 + $0x70] sm:$0xff] %v554
        %571 = vst [vmem:[%s242 + $0x78] sm:$0xff] %v555
        %s572 = sand.u32 %s153, 1
        %s573 = scalar_lea.sflag [#allocation3], %s572
        %s574 = sand.u32 %s153, 1
        %s575 = smul.addr %s574, 128
        %s576 = scalar_lea.vmem [#allocation2], %s575
        // Predicated region
        $region41: #{tpu_custom_call.1} parent=39 // pred_check
          %p577 = pneg %p163
        $region42: #{tpu_custom_call.1} parent=39 // pred_check_branch
          %579 = sbr.rel (%p577) target = $region44
        $region43: #{tpu_custom_call.1} parent=39 // pred_region
          %s580 = smul.u32 2, %s24
          %s582 = ssub.s32 2048, 2048
          %583 = vsyncadd %s573, %s582
          %s584 = smul.addr %s23, 16
          %s585 = sadd.s32 %s580, %s584
          %s586 = smul.addr %s585, 128
          %s587 = scalar_lea.hbm %s5, %s586
          %s588 = sshll.u32 %s576, 4
          %s589 = int_to_ptr.vmem [resolvable:$true] %s588
          %594 = dma.vmem_to_hbm [thread:$0]  %s589, 2048, %s587, %s573, 256, 256, 16
        $region44: #{tpu_custom_call.1} parent=39 // pred_fallthru
          _
      $region40: #{tpu_custom_call.1} parent=5 // pred_fallthru
        _
      %p595 = scmp.le.s32.totalorder 2, %s14
      // Predicated region
      $region45: #{tpu_custom_call.1} parent=5 // pred_check
        %p596 = pneg %p595
      $region46: #{tpu_custom_call.1} parent=5 // pred_check_branch
        %598 = sbr.rel (%p596) target = $region48
      $region47: #{tpu_custom_call.1} parent=5 // pred_region
        %s599 = ssub.s32 %s14, 2
        // Predicated region
        $region49: #{tpu_custom_call.1} parent=47 // pred_check
          %p600 = pneg %p169
        $region50: #{tpu_custom_call.1} parent=47 // pred_check_branch
          %602 = sbr.rel (%p600) target = $region52
        $region51: #{tpu_custom_call.1} parent=47 // pred_region
          %s603 = sand.u32 %s154, 1
          %s604 = scalar_lea.sflag [#allocation3], %s603
          %s605 = sand.u32 %s154, 1
          %s606 = smul.addr %s605, 128
          %s607 = scalar_lea.vmem [#allocation2], %s606
          %608 = dma.done %s604, 2048
        $region52: #{tpu_custom_call.1} parent=47 // pred_fallthru
          _
      $region48: #{tpu_custom_call.1} parent=5 // pred_fallthru
        _
    $region6: #{tpu_custom_call.1} parent=1 // loop_footer
      %s18 = sadd.s32 1, %s14
    $region7: #{tpu_custom_call.1} parent=1 // loop_footer_branch
      %13 = sbr.rel target = $region3
    $region8: #{tpu_custom_call.1} parent=1 // loop_exit
      _
    %609 = vsyncpa [#allocation3], 1
    %s610 = scalar_lea.sflag [#allocation3], 1
    %611 = vsyncpa %s610, 1

// kernel: tpu_custom_call.1
$region0: #{tpu_custom_call.1}
  #allocation0 [shape = 'u32[]', space=smem, size = 0x4, offset = 0x4, fixed_abs, tag = 'smem constant byte address 0x4 - core index']
  #allocation1 [shape = 'u32[144,128]{1,0:T(1,128)}', space=vmem, size = 0x12000, scoped, tag = 'internal scratch']
  %s0 = inlined_call_operand.vmem [shape: f32[2,4,256], index: 0, kind: input, shape index: {}]
  %s1 = inlined_call_operand.vmem [shape: bf16[32,4], index: 1, kind: input, shape index: {}]
  %s2 = inlined_call_operand.vmem [shape: f32[32,1], index: 2, kind: input, shape index: {}]
  %s3 = inlined_call_operand.vmem [shape: bf16[64,32], index: 3, kind: input, shape index: {}]
  %s4 = inlined_call_operand.vmem [shape: f32[64,1], index: 4, kind: input, shape index: {}]
  %s5 = inlined_call_operand.hbm [shape: f32[2,64,256], index: 5, kind: output, shape index: {}]
  %s6 = sld [smem:[#allocation0]]
  $region53: #{tpu_custom_call.1} parent=0
    _
  %s8 = ssub.s32 1, %s6
  %s9 = scalar_select 0, %s8, %s6
  $region1: #{tpu_custom_call.1} parent=0
    #allocation2 [shape = 'u8[131072]{0}', space=vmem, size = 0x20000, scoped, tag = 'output window, operand 0']
    #allocation3 [shape = 's32[2]{0}', space=sflag, size = 0x8, scoped, tag = 'scoped memory for tpu_custom_call.1']
    %10 = vsyncpa [#allocation3], 0
    %s11 = scalar_lea.sflag [#allocation3], 1
    %12 = vsyncpa %s11, 0
    loop: start=0, step=1, limit=4
    $region2: #{tpu_custom_call.1} parent=1 // loop_pre_header
      _
    $region3: #{tpu_custom_call.1} parent=1 // loop_header
      %s14 = sphi 0, %s18
      %p15 = scmp.ge.s32.totalorder %s14, 4
      %s21 = sphi 0, %s33
      %s22 = sphi 0, %s29
      %s23 = sphi 0, %s21
      %s24 = sphi 0, %s22
      %s25 = sphi 0, %s23
      %s26 = sphi 0, %s24
      %s38 = sphi 0, %s40
      %s41 = sphi 0, %s38
      %s42 = sphi 0, %s41
      %s58 = sphi 0, %s42
      %s62 = sphi 0, %s62
      %s64 = sphi 0, %s62
      %s65 = sphi 0, %s64
      %s79 = sphi 0, %s65
      %s83 = sphi 0, %s83
      %s85 = sphi 0, %s83
      %s86 = sphi 0, %s85
      %s100 = sphi 0, %s86
      %s104 = sphi 0, %s104
      %s106 = sphi 0, %s104
      %s107 = sphi 0, %s106
      %s121 = sphi 0, %s107
      %s125 = sphi 0, %s125
      %s127 = sphi 0, %s125
      %s128 = sphi 0, %s127
      %s142 = sphi 0, %s128
      %s150 = sphi 0, %s152
      %s153 = sphi 0, %s150
      %s154 = sphi 0, %s153
      %s170 = sphi 0, %s154
    $region4: #{tpu_custom_call.1} parent=1 // loop_header_branch
      %17 = sbr.rel (%p15) target = $region8
    $region5: #{tpu_custom_call.1} parent=1 // loop_body
      %s19 = ssub.s32 %s14, 1
      %s20 = ssub.s32 %s14, 2
      %s27 = sadd.s32 1, %s22
      %p28 = scmp.ge.s32.totalorder %s27, 1
      %s29 = scalar_select %p28, 0, %s27
      %s30 = sadd.s32 1, %s21
      %s31 = scalar_select %p28, %s30, %s21
      %p32 = scmp.ge.s32.totalorder %s31, 2
      %s33 = scalar_select %p32, 0, %s31
      %s34 = ssub.s32 %s21, %s33
      %s35 = ssub.s32 %s22, %s29
      %s36 = sor.u32 %s34, %s35
      %p37 = scmp.eq.s32.totalorder %s36, 0
      %s39 = sadd.s32 %s38, 1
      %s40 = scalar_select %p37, %s38, %s39
      %p43 = pneg %p37
      %p44 = scmp.eq.s32.totalorder %s14, 1
      %p45 = por %p43, %p44
      %p46 = scmp.ne.s32.totalorder %s38, %s41
      %p47 = scmp.eq.s32.totalorder %s14, 0
      %p48 = por %p46, %p47
      %p49 = scmp.ne.s32.totalorder %s38, %s41
      %p50 = scmp.eq.s32.totalorder %s19, 1
      %p51 = por %p49, %p50
      %p52 = scmp.ne.s32.totalorder %s41, %s42
      %p53 = scmp.eq.s32.totalorder %s19, 0
      %p54 = por %p52, %p53
      %p55 = scmp.ne.s32.totalorder %s41, %s42
      %p56 = scmp.eq.s32.totalorder %s20, 1
      %p57 = por %p55, %p56
      %p59 = scmp.ne.s32.totalorder %s42, %s58
      %p60 = scmp.eq.s32.totalorder %s20, 0
      %p61 = por %p59, %p60
      %s63 = sadd.s32 %s62, 1
      %p66 = scmp.eq.s32.totalorder %s14, 1
      %p67 = scmp.ne.s32.totalorder %s62, %s64
      %p68 = scmp.eq.s32.totalorder %s14, 0
      %p69 = por %p67, %p68
      %p70 = scmp.ne.s32.totalorder %s62, %s64
      %p71 = scmp.eq.s32.totalorder %s19, 1
      %p72 = por %p70, %p71
      %p73 = scmp.ne.s32.totalorder %s64, %s65
      %p74 = scmp.eq.s32.totalorder %s19, 0
      %p75 = por %p73, %p74
      %p76 = scmp.ne.s32.totalorder %s64, %s65
      %p77 = scmp.eq.s32.totalorder %s20, 1
      %p78 = por %p76, %p77
      %p80 = scmp.ne.s32.totalorder %s65, %s79
      %p81 = scmp.eq.s32.totalorder %s20, 0
      %p82 = por %p80, %p81
      %s84 = sadd.s32 %s83, 1
      %p87 = scmp.eq.s32.totalorder %s14, 1
      %p88 = scmp.ne.s32.totalorder %s83, %s85
      %p89 = scmp.eq.s32.totalorder %s14, 0
      %p90 = por %p88, %p89
      %p91 = scmp.ne.s32.totalorder %s83, %s85
      %p92 = scmp.eq.s32.totalorder %s19, 1
      %p93 = por %p91, %p92
      %p94 = scmp.ne.s32.totalorder %s85, %s86
      %p95 = scmp.eq.s32.totalorder %s19, 0
      %p96 = por %p94, %p95
      %p97 = scmp.ne.s32.totalorder %s85, %s86
      %p98 = scmp.eq.s32.totalorder %s20, 1
      %p99 = por %p97, %p98
      %p101 = scmp.ne.s32.totalorder %s86, %s100
      %p102 = scmp.eq.s32.totalorder %s20, 0
      %p103 = por %p101, %p102
      %s105 = sadd.s32 %s104, 1
      %p108 = scmp.eq.s32.totalorder %s14, 1
      %p109 = scmp.ne.s32.totalorder %s104, %s106
      %p110 = scmp.eq.s32.totalorder %s14, 0
      %p111 = por %p109, %p110
      %p112 = scmp.ne.s32.totalorder %s104, %s106
      %p113 = scmp.eq.s32.totalorder %s19, 1
      %p114 = por %p112, %p113
      %p115 = scmp.ne.s32.totalorder %s106, %s107
      %p116 = scmp.eq.s32.totalorder %s19, 0
      %p117 = por %p115, %p116
      %p118 = scmp.ne.s32.totalorder %s106, %s107
      %p119 = scmp.eq.s32.totalorder %s20, 1
      %p120 = por %p118, %p119
      %p122 = scmp.ne.s32.totalorder %s107, %s121
      %p123 = scmp.eq.s32.totalorder %s20, 0
      %p124 = por %p122, %p123
      %s126 = sadd.s32 %s125, 1
      %p129 = scmp.eq.s32.totalorder %s14, 1
      %p130 = scmp.ne.s32.totalorder %s125, %s127
      %p131 = scmp.eq.s32.totalorder %s14, 0
      %p132 = por %p130, %p131
      %p133 = scmp.ne.s32.totalorder %s125, %s127
      %p134 = scmp.eq.s32.totalorder %s19, 1
      %p135 = por %p133, %p134
      %p136 = scmp.ne.s32.totalorder %s127, %s128
      %p137 = scmp.eq.s32.totalorder %s19, 0
      %p138 = por %p136, %p137
      %p139 = scmp.ne.s32.totalorder %s127, %s128
      %p140 = scmp.eq.s32.totalorder %s20, 1
      %p141 = por %p139, %p140
      %p143 = scmp.ne.s32.totalorder %s128, %s142
      %p144 = scmp.eq.s32.totalorder %s20, 0
      %p145 = por %p143, %p144
      %s146 = ssub.s32 %s21, %s33
      %s147 = ssub.s32 %s22, %s29
      %s148 = sor.u32 %s146, %s147
      %p149 = scmp.eq.s32.totalorder %s148, 0
      %s151 = sadd.s32 %s150, 1
      %s152 = scalar_select %p149, %s150, %s151
      %p155 = pneg %p149
      %p156 = scmp.eq.s32.totalorder %s14, 1
      %p157 = por %p155, %p156
      %p158 = scmp.ne.s32.totalorder %s150, %s153
      %p159 = scmp.eq.s32.totalorder %s14, 0
      %p160 = por %p158, %p159
      %p161 = scmp.ne.s32.totalorder %s150, %s153
      %p162 = scmp.eq.s32.totalorder %s19, 1
      %p163 = por %p161, %p162
      %p164 = scmp.ne.s32.totalorder %s153, %s154
      %p165 = scmp.eq.s32.totalorder %s19, 0
      %p166 = por %p164, %p165
      %p167 = scmp.ne.s32.totalorder %s153, %s154
      %p168 = scmp.eq.s32.totalorder %s20, 1
      %p169 = por %p167, %p168
      %p171 = scmp.ne.s32.totalorder %s154, %s170
      %p172 = scmp.eq.s32.totalorder %s20, 0
      %p173 = por %p171, %p172
      %p174 = scmp.le.s32.totalorder 1, %s14
      %p175 = scmp.lt.s32.totalorder %s14, 3
      %p176 = pnand %p174, %p175
      %p177 = pneg %p176
      // Predicated region
      $region9: #{tpu_custom_call.1} parent=5 // pred_check
        _
      $region10: #{tpu_custom_call.1} parent=5 // pred_check_branch
        %179 = sbr.rel (%p176) target = $region12
      $region11: #{tpu_custom_call.1} parent=5 // pred_region
        %s180 = ssub.s32 %s14, 1
        // Predicated region
        $region13: #{tpu_custom_call.1} parent=11 // pred_check
          %p181 = pneg %p75
        $region14: #{tpu_custom_call.1} parent=11 // pred_check_branch
          %183 = sbr.rel (%p181) target = $region16
        $region15: #{tpu_custom_call.1} parent=11 // pred_region
          _
        $region16: #{tpu_custom_call.1} parent=11 // pred_fallthru
          _
        // Predicated region
        $region17: #{tpu_custom_call.1} parent=11 // pred_check
          %p184 = pneg %p96
        $region18: #{tpu_custom_call.1} parent=11 // pred_check_branch
          %186 = sbr.rel (%p184) target = $region20
        $region19: #{tpu_custom_call.1} parent=11 // pred_region
          _
        $region20: #{tpu_custom_call.1} parent=11 // pred_fallthru
          _
        // Predicated region
        $region21: #{tpu_custom_call.1} parent=11 // pred_check
          %p187 = pneg %p117
        $region22: #{tpu_custom_call.1} parent=11 // pred_check_branch
          %189 = sbr.rel (%p187) target = $region24
        $region23: #{tpu_custom_call.1} parent=11 // pred_region
          _
        $region24: #{tpu_custom_call.1} parent=11 // pred_fallthru
          _
        // Predicated region
        $region25: #{tpu_custom_call.1} parent=11 // pred_check
          %p190 = pneg %p138
        $region26: #{tpu_custom_call.1} parent=11 // pred_check_branch
          %192 = sbr.rel (%p190) target = $region28
        $region27: #{tpu_custom_call.1} parent=11 // pred_region
          _
        $region28: #{tpu_custom_call.1} parent=11 // pred_fallthru
          _
      $region12: #{tpu_custom_call.1} parent=5 // pred_fallthru
        _
      %p193 = scmp.lt.s32.totalorder %s14, 2
      // Predicated region
      $region29: #{tpu_custom_call.1} parent=5 // pred_check
        %p194 = pneg %p193
      $region30: #{tpu_custom_call.1} parent=5 // pred_check_branch
        %196 = sbr.rel (%p194) target = $region32
      $region31: #{tpu_custom_call.1} parent=5 // pred_region
        // Predicated region
        $region33: #{tpu_custom_call.1} parent=31 // pred_check
          %p197 = pneg %p48
        $region34: #{tpu_custom_call.1} parent=31 // pred_check_branch
          %199 = sbr.rel (%p197) target = $region36
        $region35: #{tpu_custom_call.1} parent=31 // pred_region
          %s200 = smul.u32 2, %s22
          %p201 = scmp.lt.s32.totalorder %s21, 1
          %s202 = scalar_select %p201, %s21, 1
          %p203 = scmp.lt.s32.totalorder %s200, 1
          %s204 = scalar_select %p203, %s200, 1
          %s205 = smul.addr %s202, 2
          %s206 = sadd.s32 %s204, %s205
          %s207 = smul.addr %s206, 4
          %s208 = scalar_lea.vmem %s0, %s207
          %s209 = smul.u32 2, %s22
        $region36: #{tpu_custom_call.1} parent=31 // pred_fallthru
          _
      $region32: #{tpu_custom_call.1} parent=5 // pred_fallthru
        _
      %p210 = scmp.le.s32.totalorder 1, %s14
      %p211 = scmp.lt.s32.totalorder %s14, 3
      %p212 = pnand %p210, %p211
      %p213 = pneg %p212
      // Predicated region
      $region37: #{tpu_custom_call.1} parent=5 // pred_check
        _
      $region38: #{tpu_custom_call.1} parent=5 // pred_check_branch
        %215 = sbr.rel (%p212) target = $region40
      $region39: #{tpu_custom_call.1} parent=5 // pred_region
        %s216 = ssub.s32 %s14, 1
        %s217 = smul.u32 2, %s24
        %p218 = scmp.lt.s32.totalorder %s23, 1
        %s219 = scalar_select %p218, %s23, 1
        %p220 = scmp.lt.s32.totalorder %s217, 1
        %s221 = scalar_select %p220, %s217, 1
        %s222 = smul.addr %s219, 2
        %s223 = sadd.s32 %s221, %s222
        %s224 = smul.addr %s223, 4
        %s225 = scalar_lea.vmem %s0, %s224
        %p226 = pneg %p54
        %p227 = pneg %p51
        %p228 = pneg %p75
        %p229 = pneg %p72
        %p230 = pneg %p96
        %p231 = pneg %p93
        %p232 = pneg %p117
        %p233 = pneg %p114
        %p234 = pneg %p138
        %p235 = pneg %p135
        %p236 = pneg %p166
        %p237 = pneg %p163
        %s238 = sand.u32 %s153, 1
        %s239 = scalar_lea.sflag [#allocation3], %s238
        %s240 = sand.u32 %s153, 1
        %s241 = smul.addr %s240, 128
        %s242 = scalar_lea.vmem [#allocation2], %s241
        %s243 = smul.u32 2, %s24
        %p244 = scmp.lt.s32.totalorder %s23, 1
        %s245 = scalar_select %p244, %s23, 1
        %p246 = scmp.lt.s32.totalorder %s243, 1
        %s247 = scalar_select %p246, %s243, 1
        %s248 = smul.addr %s245, 2
        %s249 = sadd.s32 %s247, %s248
        %s250 = smul.addr %s249, 4
        %s251 = scalar_lea.vmem %s0, %s250
        %s252 = smul.u32 2, %s24
        %s253 = smul.u32 2, %s24
        %v255 = vld [vmem:[%s251] sm:$0xff]
        %v256 = vld [vmem:[%s1] sm:$0xf]
        %v257 = vld [vmem:[%s1 + $0x4] sm:$0xf]
        %v258 = vld [vmem:[%s1 + $0x8] sm:$0xf]
        %v259 = vld [vmem:[%s1 + $0xc] sm:$0xf]
        %v260 = vld [vmem:[%s2] sm:$0xff]
        %v261 = vld [vmem:[%s2 + $0x8] sm:$0xff]
        %v262 = vld [vmem:[%s2 + $0x10] sm:$0xff]
        %v263 = vld [vmem:[%s2 + $0x18] sm:$0xff]
        %v265 = vcombine.high %v255, %v255
        %v267 = vpack.c.bf16 %v255, %v255
        %v268 = vpack.c.bf16 %v265, %v265
        %270 = vset.pattern.permute.xlu0 0
        %271 = vperm.xlu0 %270, %v260
        %v272 = vpop.permute.xlu0 %271
        %275 = vset.pattern.permute.xlu0 0
        %276 = vperm.xlu0 %275, %v261
        %v277 = vpop.permute.xlu0 %276
        %280 = vset.pattern.permute.xlu0 0
        %281 = vperm.xlu0 %280, %v262
        %v282 = vpop.permute.xlu0 %281
        %285 = vset.pattern.permute.xlu0 0
        %286 = vperm.xlu0 %285, %v263
        %v287 = vpop.permute.xlu0 %286
        %v293 = vunpack.c.l.b16 %v256
        %v294 = vunpack.c.l.b16 %v257
        %v295 = vunpack.c.l.b16 %v258
        %v296 = vunpack.c.l.b16 %v259
        %v297 = vpack.c.b16 %v294, %v293
        %v298 = vpack.c.b16 %v296, %v295
        %vm299 = vcmask 31744
        %v301 = vsel %vm299, %v297, 0
        %v304 = vsel %vm299, %v298, 0
        %vm306 = vcmask 1041408
        %v308 = vsel %vm306, %v267, 0
        %v311 = vsel %vm306, %v268, 0
        %313 = vmatprep.subr.bf16.mxu0 %v311
        %314 = vmatpush1.bf16.msra.mxu0 %v308
        %315 = vmatprep.subr.bf16.mxu0 0
        %316 = vmatpush1.bf16.msra.mxu0 0
        %317 = vmatprep.subr.bf16.mxu0 0
        %318 = vmatpush1.bf16.msra.mxu0 0
        %319 = vmatprep.subr.bf16.mxu0 0
        %320 = vmatpush1.bf16.msra.mxu0 0
        %321 = vmatprep.subr.bf16.mxu0 0
        %322 = vmatpush1.bf16.msra.mxu0 0
        %323 = vmatprep.subr.bf16.mxu0 0
        %324 = vmatpush1.bf16.msra.mxu0 0
        %325 = vmatprep.subr.bf16.mxu0 0
        %326 = vmatpush1.bf16.msra.mxu0 0
        %327 = vmatprep.subr.bf16.mxu0 0
        %328 = vmatpush1.bf16.msra.mxu0 0
        %329 = vmatprep.subr.bf16.mxu0 0
        %330 = vmatpush1.bf16.msra.mxu0 0
        %331 = vmatprep.subr.bf16.mxu0 0
        %332 = vmatpush1.bf16.msra.mxu0 0
        %333 = vmatprep.subr.bf16.mxu0 0
        %334 = vmatpush1.bf16.msra.mxu0 0
        %335 = vmatprep.subr.bf16.mxu0 0
        %336 = vmatpush1.bf16.msra.mxu0 0
        %337 = vmatprep.subr.bf16.mxu0 0
        %338 = vmatpush1.bf16.msra.mxu0 0
        %339 = vmatprep.subr.bf16.mxu0 0
        %340 = vmatpush1.bf16.msra.mxu0 0
        %341 = vmatprep.subr.bf16.mxu0 0
        %342 = vmatpush1.bf16.msra.mxu0 0
        %343 = vmatprep.subr.bf16.mxu0 0
        %344 = vmatpush1.bf16.msra.mxu0 0
        %345 = vmatprep.mubr.bf16.mxu0 0
        %346 = vmatmul.mubr.bf16.gmra.mrb[0].mxu0 %v301
        %v347 = vpop.f32.mrb[0].mxu0
        %v348 = vadd.f32 %v272, %v347
        %v349 = vpop.f32.mrb[0].mxu0
        %v350 = vadd.f32 %v272, %v349
        %v351 = vpop.f32.mrb[0].mxu0
        %v352 = vadd.f32 %v277, %v351
        %v353 = vpop.f32.mrb[0].mxu0
        %v354 = vadd.f32 %v277, %v353
        %355 = vmatprep.mubr.bf16.mxu0 0
        %356 = vmatmul.mubr.bf16.gmra.mrb[0].mxu0 %v304
        %v357 = vpop.f32.mrb[0].mxu0
        %v358 = vadd.f32 %v282, %v357
        %v359 = vpop.f32.mrb[0].mxu0
        %v360 = vadd.f32 %v282, %v359
        %v361 = vpop.f32.mrb[0].mxu0
        %v362 = vadd.f32 %v287, %v361
        %v363 = vpop.f32.mrb[0].mxu0
        %v364 = vadd.f32 %v287, %v363
        %365 = vdwg.mxu0
        %v366 = vmax.f32 %v348, 0.0
        %v367 = vmax.f32 %v350, 0.0
        %v368 = vmax.f32 %v352, 0.0
        %v369 = vmax.f32 %v354, 0.0
        %v370 = vmax.f32 %v358, 0.0
        %v371 = vmax.f32 %v360, 0.0
        %v372 = vmax.f32 %v362, 0.0
        %v373 = vmax.f32 %v364, 0.0
        %v374 = vld [vmem:[%s3] sm:$0xf]
        %v375 = vld [vmem:[%s3 + $0x4] sm:$0xf]
        %v376 = vld [vmem:[%s3 + $0x8] sm:$0xf]
        %v377 = vld [vmem:[%s3 + $0xc] sm:$0xf]
        %v378 = vld [vmem:[%s3 + $0x10] sm:$0xf]
        %v379 = vld [vmem:[%s3 + $0x14] sm:$0xf]
        %v380 = vld [vmem:[%s3 + $0x18] sm:$0xf]
        %v381 = vld [vmem:[%s3 + $0x1c] sm:$0xf]
        %v382 = vld [vmem:[%s4] sm:$0xff]
        %v383 = vld [vmem:[%s4 + $0x8] sm:$0xff]
        %v384 = vld [vmem:[%s4 + $0x10] sm:$0xff]
        %v385 = vld [vmem:[%s4 + $0x18] sm:$0xff]
        %v386 = vld [vmem:[%s4 + $0x20] sm:$0xff]
        %v387 = vld [vmem:[%s4 + $0x28] sm:$0xff]
        %v388 = vld [vmem:[%s4 + $0x30] sm:$0xff]
        %v389 = vld [vmem:[%s4 + $0x38] sm:$0xff]
        %v390 = vpack.c.bf16 %v368, %v366
        %v391 = vpack.c.bf16 %v369, %v367
        %v392 = vpack.c.bf16 %v372, %v370
        %v393 = vpack.c.bf16 %v373, %v371
        %395 = vset.pattern.permute.xlu0 0
        %396 = vperm.xlu0 %395, %v382
        %v397 = vpop.permute.xlu0 %396
        %400 = vset.pattern.permute.xlu0 0
        %401 = vperm.xlu0 %400, %v383
        %v402 = vpop.permute.xlu0 %401
        %405 = vset.pattern.permute.xlu0 0
        %406 = vperm.xlu0 %405, %v384
        %v407 = vpop.permute.xlu0 %406
        %410 = vset.pattern.permute.xlu0 0
        %411 = vperm.xlu0 %410, %v385
        %v412 = vpop.permute.xlu0 %411
        %415 = vset.pattern.permute.xlu0 0
        %416 = vperm.xlu0 %415, %v386
        %v417 = vpop.permute.xlu0 %416
        %420 = vset.pattern.permute.xlu0 0
        %421 = vperm.xlu0 %420, %v387
        %v422 = vpop.permute.xlu0 %421
        %425 = vset.pattern.permute.xlu0 0
        %426 = vperm.xlu0 %425, %v388
        %v427 = vpop.permute.xlu0 %426
        %430 = vset.pattern.permute.xlu0 0
        %431 = vperm.xlu0 %430, %v389
        %v432 = vpop.permute.xlu0 %431
        %v442 = vunpack.c.l.b16 %v374
        %v443 = vunpack.c.l.b16 %v375
        %v444 = vunpack.c.l.b16 %v376
        %v445 = vunpack.c.l.b16 %v377
        %v446 = vunpack.c.l.b16 %v378
        %v447 = vunpack.c.l.b16 %v379
        %v448 = vunpack.c.l.b16 %v380
        %v449 = vunpack.c.l.b16 %v381
        %v450 = vpack.c.b16 %v443, %v442
        %v451 = vpack.c.b16 %v445, %v444
        %v452 = vpack.c.b16 %v447, %v446
        %v453 = vpack.c.b16 %v449, %v448
        %vm454 = vcmask 261120
        %v456 = vsel %vm454, %v450, 0
        %v459 = vsel %vm454, %v451, 0
        %v462 = vsel %vm454, %v452, 0
        %v465 = vsel %vm454, %v453, 0
        %467 = vmatprep.subr.bf16.mxu0 %v391
        %468 = vmatpush1.bf16.msra.mxu0 %v390
        %469 = vmatprep.subr.bf16.mxu0 %v393
        %470 = vmatpush1.bf16.msra.mxu0 %v392
        %471 = vmatprep.subr.bf16.mxu0 0
        %472 = vmatpush1.bf16.msra.mxu0 0
        %473 = vmatprep.subr.bf16.mxu0 0
        %474 = vmatpush1.bf16.msra.mxu0 0
        %475 = vmatprep.subr.bf16.mxu0 0
        %476 = vmatpush1.bf16.msra.mxu0 0
        %477 = vmatprep.subr.bf16.mxu0 0
        %478 = vmatpush1.bf16.msra.mxu0 0
        %479 = vmatprep.subr.bf16.mxu0 0
        %480 = vmatpush1.bf16.msra.mxu0 0
        %481 = vmatprep.subr.bf16.mxu0 0
        %482 = vmatpush1.bf16.msra.mxu0 0
        %483 = vmatprep.subr.bf16.mxu0 0
        %484 = vmatpush1.bf16.msra.mxu0 0
        %485 = vmatprep.subr.bf16.mxu0 0
        %486 = vmatpush1.bf16.msra.mxu0 0
        %487 = vmatprep.subr.bf16.mxu0 0
        %488 = vmatpush1.bf16.msra.mxu0 0
        %489 = vmatprep.subr.bf16.mxu0 0
        %490 = vmatpush1.bf16.msra.mxu0 0
        %491 = vmatprep.subr.bf16.mxu0 0
        %492 = vmatpush1.bf16.msra.mxu0 0
        %493 = vmatprep.subr.bf16.mxu0 0
        %494 = vmatpush1.bf16.msra.mxu0 0
        %495 = vmatprep.subr.bf16.mxu0 0
        %496 = vmatpush1.bf16.msra.mxu0 0
        %497 = vmatprep.subr.bf16.mxu0 0
        %498 = vmatpush1.bf16.msra.mxu0 0
        %499 = vmatprep.mubr.bf16.mxu0 0
        %500 = vmatmul.mubr.bf16.gmra.mrb[0].mxu0 %v456
        %v501 = vpop.f32.mrb[0].mxu0
        %v502 = vadd.f32 %v397, %v501
        %v503 = vpop.f32.mrb[0].mxu0
        %v504 = vadd.f32 %v397, %v503
        %v505 = vpop.f32.mrb[0].mxu0
        %v506 = vadd.f32 %v402, %v505
        %v507 = vpop.f32.mrb[0].mxu0
        %v508 = vadd.f32 %v402, %v507
        %509 = vmatprep.mubr.bf16.mxu0 0
        %510 = vmatmul.mubr.bf16.gmra.mrb[0].mxu0 %v459
        %v511 = vpop.f32.mrb[0].mxu0
        %v512 = vadd.f32 %v407, %v511
        %v513 = vpop.f32.mrb[0].mxu0
        %v514 = vadd.f32 %v407, %v513
        %v515 = vpop.f32.mrb[0].mxu0
        %v516 = vadd.f32 %v412, %v515
        %v517 = vpop.f32.mrb[0].mxu0
        %v518 = vadd.f32 %v412, %v517
        %519 = vmatprep.mubr.bf16.mxu0 0
        %520 = vmatmul.mubr.bf16.gmra.mrb[0].mxu0 %v462
        %v521 = vpop.f32.mrb[0].mxu0
        %v522 = vadd.f32 %v417, %v521
        %v523 = vpop.f32.mrb[0].mxu0
        %v524 = vadd.f32 %v417, %v523
        %v525 = vpop.f32.mrb[0].mxu0
        %v526 = vadd.f32 %v422, %v525
        %v527 = vpop.f32.mrb[0].mxu0
        %v528 = vadd.f32 %v422, %v527
        %529 = vmatprep.mubr.bf16.mxu0 0
        %530 = vmatmul.mubr.bf16.gmra.mrb[0].mxu0 %v465
        %v531 = vpop.f32.mrb[0].mxu0
        %v532 = vadd.f32 %v427, %v531
        %v533 = vpop.f32.mrb[0].mxu0
        %v534 = vadd.f32 %v427, %v533
        %v535 = vpop.f32.mrb[0].mxu0
        %v536 = vadd.f32 %v432, %v535
        %v537 = vpop.f32.mrb[0].mxu0
        %v538 = vadd.f32 %v432, %v537
        %539 = vdwg.mxu0
        %v540 = vmax.f32 %v502, 0.0
        %v541 = vmax.f32 %v504, 0.0
        %v542 = vmax.f32 %v506, 0.0
        %v543 = vmax.f32 %v508, 0.0
        %v544 = vmax.f32 %v512, 0.0
        %v545 = vmax.f32 %v514, 0.0
        %v546 = vmax.f32 %v516, 0.0
        %v547 = vmax.f32 %v518, 0.0
        %v548 = vmax.f32 %v522, 0.0
        %v549 = vmax.f32 %v524, 0.0
        %v550 = vmax.f32 %v526, 0.0
        %v551 = vmax.f32 %v528, 0.0
        %v552 = vmax.f32 %v532, 0.0
        %v553 = vmax.f32 %v534, 0.0
        %v554 = vmax.f32 %v536, 0.0
        %v555 = vmax.f32 %v538, 0.0
        %556 = vst [vmem:[%s242] sm:$0xff] %v540
        %557 = vst [vmem:[%s242 + $0x8] sm:$0xff] %v541
        %558 = vst [vmem:[%s242 + $0x10] sm:$0xff] %v542
        %559 = vst [vmem:[%s242 + $0x18] sm:$0xff] %v543
        %560 = vst [vmem:[%s242 + $0x20] sm:$0xff] %v544
        %561 = vst [vmem:[%s242 + $0x28] sm:$0xff] %v545
        %562 = vst [vmem:[%s242 + $0x30] sm:$0xff] %v546
        %563 = vst [vmem:[%s242 + $0x38] sm:$0xff] %v547
        %564 = vst [vmem:[%s242 + $0x40] sm:$0xff] %v548
        %565 = vst [vmem:[%s242 + $0x48] sm:$0xff] %v549
        %566 = vst [vmem:[%s242 + $0x50] sm:$0xff] %v550
        %567 = vst [vmem:[%s242 + $0x58] sm:$0xff] %v551
        %568 = vst [vmem:[%s242 + $0x60] sm:$0xff] %v552
        %569 = vst [vmem:[%s242 + $0x68] sm:$0xff] %v553
        %570 = vst [vmem:[%s242 + $0x70] sm:$0xff] %v554
        %571 = vst [vmem:[%s242 + $0x78] sm:$0xff] %v555
        %s572 = sand.u32 %s153, 1
        %s573 = scalar_lea.sflag [#allocation3], %s572
        %s574 = sand.u32 %s153, 1
        %s575 = smul.addr %s574, 128
        %s576 = scalar_lea.vmem [#allocation2], %s575
        // Predicated region
        $region41: #{tpu_custom_call.1} parent=39 // pred_check
          %p577 = pneg %p163
        $region42: #{tpu_custom_call.1} parent=39 // pred_check_branch
          %579 = sbr.rel (%p577) target = $region44
        $region43: #{tpu_custom_call.1} parent=39 // pred_region
          %s580 = smul.u32 2, %s24
          %s582 = ssub.s32 2048, 2048
          %583 = vsyncadd %s573, %s582
          %s584 = smul.addr %s23, 16
          %s585 = sadd.s32 %s580, %s584
          %s586 = smul.addr %s585, 128
          %s587 = scalar_lea.hbm %s5, %s586
          %s588 = sshll.u32 %s576, 4
          %s589 = int_to_ptr.vmem [resolvable:$true] %s588
          %594 = dma.vmem_to_hbm [thread:$0]  %s589, 2048, %s587, %s573, 256, 256, 16
        $region44: #{tpu_custom_call.1} parent=39 // pred_fallthru
          _
      $region40: #{tpu_custom_call.1} parent=5 // pred_fallthru
        _
      %p595 = scmp.le.s32.totalorder 2, %s14
      // Predicated region
      $region45: #{tpu_custom_call.1} parent=5 // pred_check
        %p596 = pneg %p595
      $region46: #{tpu_custom_call.1} parent=5 // pred_check_branch
        %598 = sbr.rel (%p596) target = $region48
      $region47: #{tpu_custom_call.1} parent=5 // pred_region
        %s599 = ssub.s32 %s14, 2
        // Predicated region
        $region49: #{tpu_custom_call.1} parent=47 // pred_check
          %p600 = pneg %p169
        $region50: #{tpu_custom_call.1} parent=47 // pred_check_branch
          %602 = sbr.rel (%p600) target = $region52
        $region51: #{tpu_custom_call.1} parent=47 // pred_region
          %s603 = sand.u32 %s154, 1
          %s604 = scalar_lea.sflag [#allocation3], %s603
          %s605 = sand.u32 %s154, 1
          %s606 = smul.addr %s605, 128
          %s607 = scalar_lea.vmem [#allocation2], %s606
          %608 = dma.done %s604, 2048
        $region52: #{tpu_custom_call.1} parent=47 // pred_fallthru
          _
      $region48: #{tpu_custom_call.1} parent=5 // pred_fallthru
        _
    $region6: #{tpu_custom_call.1} parent=1 // loop_footer
      %s18 = sadd.s32 1, %s14
    $region7: #{tpu_custom_call.1} parent=1 // loop_footer_branch
      %13 = sbr.rel target = $region3
    $region8: #{tpu_custom_call.1} parent=1 // loop_exit
      _
    %609 = vsyncpa [#allocation3], 1
    %s610 = scalar_lea.sflag [#allocation3], 1
    %611 = vsyncpa %s610, 1

</llo_original>
